<compile_context>
chip_gen: v5e
topology: v5e:2x2
jax: 0.10.0
libtpu: 0.0.40
codegen_flags: <defaults>
</compile_context>

<pallas_src>
import functools

import jax
import jax.numpy as jnp
from jax import lax
from jax.experimental import pallas as pl
from jax.experimental.pallas import tpu as pltpu

_LANES = 128   # vreg lane width
_CHUNK = 32    # rows per inner-loop step (multiple of 8 sublanes)


def _nps_kernel(pa_ref, x_ref, out_ref, *, n_colors, n_pix, inv_numel,
                chunk, num_tiles, n_chunks_body, n_chunks_last, mask_last):
    # pa_ref : (3*N,)               f32 SMEM  -- flattened printable triplets
    # x_ref  : (3, tile_rows, 128)  f32 VMEM  -- lane-dense tile of flattened pixels
    # out_ref: (1, 1)               f32 VMEM  -- running NPS accumulator (revisited)
    i = pl.program_id(0)
    tile_rows = x_ref.shape[1]

    # Zero the accumulator on the first grid step.
    @pl.when(i == 0)
    def _():
        out_ref[...] = jnp.zeros_like(out_ref)

    # Printable-color scalars with the +1e-6 folded in (scalar-slot work).
    p = [pa_ref[j] - 1e-6 for j in range(3 * n_colors)]

    if mask_last:
        row_ids = lax.broadcasted_iota(jnp.int32, (chunk, _LANES), 0)
        lane_ids = lax.broadcasted_iota(jnp.int32, (chunk, _LANES), 1)
        offs = row_ids * _LANES + lane_ids        # chunk-local pixel offsets
    else:
        offs = None

    def chunk_min_dist(c):
        start = pl.multiple_of(c * chunk, chunk)
        r = x_ref[0, pl.ds(start, chunk), :]      # (chunk, 128)
        g = x_ref[1, pl.ds(start, chunk), :]
        b = x_ref[2, pl.ds(start, chunk), :]
        min_sq = None
        for n in range(n_colors):                 # static unroll; pure VPU work
            dr = r - p[3 * n + 0]
            dg = g - p[3 * n + 1]
            db = b - p[3 * n + 2]
            sq = dr * dr + dg * dg + db * db
            min_sq = sq if min_sq is None else jnp.minimum(min_sq, sq)
        # Single EUP sqrt per chunk (min and sqrt commute: sqrt is monotone).
        return jnp.sqrt(min_sq + 1e-6)

    def run(n_chunks, masked):
        def body(c, acc):
            d = chunk_min_dist(c)
            if masked:
                base = (i * tile_rows + c * chunk) * _LANES
                d = jnp.where(base + offs < n_pix, d, 0.0)
            return acc + d

        acc = lax.fori_loop(0, n_chunks, body,
                            jnp.zeros((chunk, _LANES), jnp.float32))
        out_ref[...] += jnp.sum(acc) * inv_numel

    if num_tiles == 1:
        run(n_chunks_last, mask_last)
    elif (not mask_last) and n_chunks_last == n_chunks_body:
        run(n_chunks_body, False)
    else:
        @pl.when(i < num_tiles - 1)
        def _():
            run(n_chunks_body, False)

        @pl.when(i == num_tiles - 1)
        def _():
            run(n_chunks_last, mask_last)


def nps_score(adv_patch, printable_triplets, *, max_tile_rows=256):
    """adv_patch: (3, S, S) f32; printable_triplets: (N, 3) f32 -> scalar f32 NPS."""
    n_colors = int(printable_triplets.shape[0])
    if n_colors == 0:
        raise ValueError("need at least one printable color triplet")
    assert max_tile_rows % _CHUNK == 0 and max_tile_rows >= _CHUNK

    adv_patch = adv_patch.astype(jnp.float32)
    printable_triplets = printable_triplets.astype(jnp.float32)

    c, s1, s2 = adv_patch.shape
    n_pix = s1 * s2
    numel = c * n_pix                                   # == torch.numel(adv_patch)

    # Lane-dense layout: flatten pixels to rows of 128 lanes; pad only up to a
    # multiple of _CHUNK rows. The last grid block may be partial; its garbage
    # rows are never read (the last-tile loop trip count is shortened).
    rows_needed = (n_pix + _LANES - 1) // _LANES
    rows_padded = ((rows_needed + _CHUNK - 1) // _CHUNK) * _CHUNK
    tile_rows = min(max_tile_rows, rows_padded)
    grid = (rows_padded + tile_rows - 1) // tile_rows
    last_tile_rows = rows_padded - (grid - 1) * tile_rows

    flat = adv_patch.reshape(c, n_pix)
    pad = rows_padded * _LANES - n_pix
    if pad:
        flat = jnp.pad(flat, ((0, 0), (0, pad)))        # zeros, masked in-kernel
    x = flat.reshape(c, rows_padded, _LANES)

    kernel = functools.partial(
        _nps_kernel,
        n_colors=n_colors,
        n_pix=n_pix,
        inv_numel=1.0 / numel,
        chunk=_CHUNK,
        num_tiles=grid,
        n_chunks_body=tile_rows // _CHUNK,
        n_chunks_last=last_tile_rows // _CHUNK,
        mask_last=pad > 0,
    )

    out = pl.pallas_call(
        kernel,
        out_shape=jax.ShapeDtypeStruct((1, 1), jnp.float32),
        grid=(grid,),
        in_specs=[
            # 1D SMEM triplets (2D [N,3] SMEM would pad to [8,128] words).
            pl.BlockSpec((3 * n_colors,), lambda i: (0,),
                         memory_space=pltpu.SMEM),
            pl.BlockSpec((c, tile_rows, _LANES), lambda i: (0, i, 0)),
        ],
        # Scalar accumulator: same output block every step -> "arbitrary" axis.
        out_specs=pl.BlockSpec((1, 1), lambda i: (0, 0)),
        compiler_params=pltpu.CompilerParams(
            dimension_semantics=("arbitrary",)),
    )(printable_triplets.reshape(-1), x)

    return out[0, 0]


def make_printability_triplets(n_colors):
    """Deterministic synthetic stand-in for the printability file: (N, 3) RGB triplets."""
    # TODO(synk): the original module parses a printability text file at init;
    # file I/O is replaced by this in-script deterministic generator.
    idx = jnp.arange(n_colors, dtype=jnp.float32)
    return jnp.stack(
        [
            (idx + 1.0) / (n_colors + 1.0),
            jnp.flip((idx + 1.0) / (n_colors + 1.0)),
            ((idx * 7.0) % n_colors + 0.5) / n_colors,
        ],
        axis=1,
    )  # (N, 3)


def nps_reference(adv_patch, printability_array):
    """Plain-JAX reference mirroring the PyTorch forward, for validation."""
    color_dist = adv_patch[None] - printability_array + 1e-6
    color_dist = color_dist ** 2
    color_dist = jnp.sum(color_dist, axis=1) + 1e-6
    color_dist = jnp.sqrt(color_dist)
    color_dist_prod = jnp.min(color_dist, axis=0)
    return jnp.sum(color_dist_prod) / adv_patch.size


if __name__ == "__main__":
    side = 16        # patch_side
    n_colors = 8     # number of printability triplets (synthetic)

    key = jax.random.PRNGKey(0)
    adv_patch = jax.random.uniform(key, (3, side, side), dtype=jnp.float32)
    triplets = make_printability_triplets(n_colors)            # (N, 3)

    out = nps_score(adv_patch, triplets)
    out = jax.block_until_ready(out)

    pa_full = jnp.broadcast_to(triplets[:, :, None, None],
                               (n_colors, 3, side, side))      # reference only
    ref = nps_reference(adv_patch, pa_full)
    assert jnp.allclose(out, ref, rtol=1e-5, atol=1e-6), (out, ref)

    print("KERNEL_OK")
</pallas_src>

<mosaic_0001>
module attributes {stable_mosaic.version = 11 : i64} {
  func.func @_nps_kernel(%arg0: i32, %arg1: memref<24xf32, #tpu.memory_space<smem>>, %arg2: memref<3x32x128xf32, #tpu.memory_space<vmem>>, %arg3: memref<1x1xf32, #tpu.memory_space<vmem>>) attributes {dimension_semantics = [#tpu.dimension_semantics<arbitrary>], iteration_bounds = array<i64: 1>, scalar_prefetch = 0 : i64, scratch_operands = 0 : i64, tpu.core_type = #tpu.core_type<tc>, window_params = [{transform_indices = @transform_0, window_bounds = array<i64: 24>}, {transform_indices = @transform_1, window_bounds = array<i64: 3, 32, 128>}, {pipeline_mode = #tpu.pipeline_mode<synchronous>, transform_indices = @transform_2, window_bounds = array<i64: 1, 1>}]} {
    %c0_i32 = arith.constant 0 : i32
    %0 = arith.cmpi eq, %arg0, %c0_i32 : i32
    %1 = arith.extui %0 : i1 to i32
    %c0_i32_0 = arith.constant 0 : i32
    %2 = arith.cmpi ne, %1, %c0_i32_0 : i32
    scf.if %2 {
      %cst_43 = arith.constant 0.000000e+00 : f32
      %186 = vector.broadcast %cst_43 : f32 to vector<1x1xf32>
      %c0_44 = arith.constant 0 : index
      %c0_45 = arith.constant 0 : index
      %187 = vector.load %arg3[%c0_44, %c0_45] : memref<1x1xf32, #tpu.memory_space<vmem>>, vector<1x1xf32>
      tpu.vector_store %arg3[%c0_44, %c0_45], %186 {strides = array<i32>} : memref<1x1xf32, #tpu.memory_space<vmem>>, vector<1x1xf32>,
    } else {
    }
    %c0 = arith.constant 0 : index
    %3 = memref.load %arg1[%c0] : memref<24xf32, #tpu.memory_space<smem>>
    %cst = arith.constant 9.99999997E-7 : f32
    %4 = arith.subf %3, %cst : f32
    %c1 = arith.constant 1 : index
    %5 = memref.load %arg1[%c1] : memref<24xf32, #tpu.memory_space<smem>>
    %cst_1 = arith.constant 9.99999997E-7 : f32
    %6 = arith.subf %5, %cst_1 : f32
    %c2 = arith.constant 2 : index
    %7 = memref.load %arg1[%c2] : memref<24xf32, #tpu.memory_space<smem>>
    %cst_2 = arith.constant 9.99999997E-7 : f32
    %8 = arith.subf %7, %cst_2 : f32
    %c3 = arith.constant 3 : index
    %9 = memref.load %arg1[%c3] : memref<24xf32, #tpu.memory_space<smem>>
    %cst_3 = arith.constant 9.99999997E-7 : f32
    %10 = arith.subf %9, %cst_3 : f32
    %c4 = arith.constant 4 : index
    %11 = memref.load %arg1[%c4] : memref<24xf32, #tpu.memory_space<smem>>
    %cst_4 = arith.constant 9.99999997E-7 : f32
    %12 = arith.subf %11, %cst_4 : f32
    %c5 = arith.constant 5 : index
    %13 = memref.load %arg1[%c5] : memref<24xf32, #tpu.memory_space<smem>>
    %cst_5 = arith.constant 9.99999997E-7 : f32
    %14 = arith.subf %13, %cst_5 : f32
    %c6 = arith.constant 6 : index
    %15 = memref.load %arg1[%c6] : memref<24xf32, #tpu.memory_space<smem>>
    %cst_6 = arith.constant 9.99999997E-7 : f32
    %16 = arith.subf %15, %cst_6 : f32
    %c7 = arith.constant 7 : index
    %17 = memref.load %arg1[%c7] : memref<24xf32, #tpu.memory_space<smem>>
    %cst_7 = arith.constant 9.99999997E-7 : f32
    %18 = arith.subf %17, %cst_7 : f32
    %c8 = arith.constant 8 : index
    %19 = memref.load %arg1[%c8] : memref<24xf32, #tpu.memory_space<smem>>
    %cst_8 = arith.constant 9.99999997E-7 : f32
    %20 = arith.subf %19, %cst_8 : f32
    %c9 = arith.constant 9 : index
    %21 = memref.load %arg1[%c9] : memref<24xf32, #tpu.memory_space<smem>>
    %cst_9 = arith.constant 9.99999997E-7 : f32
    %22 = arith.subf %21, %cst_9 : f32
    %c10 = arith.constant 10 : index
    %23 = memref.load %arg1[%c10] : memref<24xf32, #tpu.memory_space<smem>>
    %cst_10 = arith.constant 9.99999997E-7 : f32
    %24 = arith.subf %23, %cst_10 : f32
    %c11 = arith.constant 11 : index
    %25 = memref.load %arg1[%c11] : memref<24xf32, #tpu.memory_space<smem>>
    %cst_11 = arith.constant 9.99999997E-7 : f32
    %26 = arith.subf %25, %cst_11 : f32
    %c12 = arith.constant 12 : index
    %27 = memref.load %arg1[%c12] : memref<24xf32, #tpu.memory_space<smem>>
    %cst_12 = arith.constant 9.99999997E-7 : f32
    %28 = arith.subf %27, %cst_12 : f32
    %c13 = arith.constant 13 : index
    %29 = memref.load %arg1[%c13] : memref<24xf32, #tpu.memory_space<smem>>
    %cst_13 = arith.constant 9.99999997E-7 : f32
    %30 = arith.subf %29, %cst_13 : f32
    %c14 = arith.constant 14 : index
    %31 = memref.load %arg1[%c14] : memref<24xf32, #tpu.memory_space<smem>>
    %cst_14 = arith.constant 9.99999997E-7 : f32
    %32 = arith.subf %31, %cst_14 : f32
    %c15 = arith.constant 15 : index
    %33 = memref.load %arg1[%c15] : memref<24xf32, #tpu.memory_space<smem>>
    %cst_15 = arith.constant 9.99999997E-7 : f32
    %34 = arith.subf %33, %cst_15 : f32
    %c16 = arith.constant 16 : index
    %35 = memref.load %arg1[%c16] : memref<24xf32, #tpu.memory_space<smem>>
    %cst_16 = arith.constant 9.99999997E-7 : f32
    %36 = arith.subf %35, %cst_16 : f32
    %c17 = arith.constant 17 : index
    %37 = memref.load %arg1[%c17] : memref<24xf32, #tpu.memory_space<smem>>
    %cst_17 = arith.constant 9.99999997E-7 : f32
    %38 = arith.subf %37, %cst_17 : f32
    %c18 = arith.constant 18 : index
    %39 = memref.load %arg1[%c18] : memref<24xf32, #tpu.memory_space<smem>>
    %cst_18 = arith.constant 9.99999997E-7 : f32
    %40 = arith.subf %39, %cst_18 : f32
    %c19 = arith.constant 19 : index
    %41 = memref.load %arg1[%c19] : memref<24xf32, #tpu.memory_space<smem>>
    %cst_19 = arith.constant 9.99999997E-7 : f32
    %42 = arith.subf %41, %cst_19 : f32
    %c20 = arith.constant 20 : index
    %43 = memref.load %arg1[%c20] : memref<24xf32, #tpu.memory_space<smem>>
    %cst_20 = arith.constant 9.99999997E-7 : f32
    %44 = arith.subf %43, %cst_20 : f32
    %c21 = arith.constant 21 : index
    %45 = memref.load %arg1[%c21] : memref<24xf32, #tpu.memory_space<smem>>
    %cst_21 = arith.constant 9.99999997E-7 : f32
    %46 = arith.subf %45, %cst_21 : f32
    %c22 = arith.constant 22 : index
    %47 = memref.load %arg1[%c22] : memref<24xf32, #tpu.memory_space<smem>>
    %cst_22 = arith.constant 9.99999997E-7 : f32
    %48 = arith.subf %47, %cst_22 : f32
    %c23 = arith.constant 23 : index
    %49 = memref.load %arg1[%c23] : memref<24xf32, #tpu.memory_space<smem>>
    %cst_23 = arith.constant 9.99999997E-7 : f32
    %50 = arith.subf %49, %cst_23 : f32
    %51 = tpu.iota {dimensions = array<i32: 0>} : vector<32x128xi32>
    %52 = tpu.iota {dimensions = array<i32: 1>} : vector<32x128xi32>
    %c128_i32 = arith.constant 128 : i32
    %53 = vector.broadcast %c128_i32 : i32 to vector<32x128xi32>
    %54 = arith.muli %51, %53 : vector<32x128xi32>
    %55 = arith.addi %54, %52 : vector<32x128xi32>
    %cst_24 = arith.constant 0.000000e+00 : f32
    %56 = vector.broadcast %cst_24 : f32 to vector<32x128xf32>
    %c0_i32_25 = arith.constant 0 : i32
    %c32_i32 = arith.constant 32 : i32
    %57 = arith.muli %c0_i32_25, %c32_i32 : i32
    %58 = tpu.assume_multiple %57, 32 : i32
    %c0_26 = arith.constant 0 : index
    %59 = arith.index_cast %58 : i32 to index
    %c0_27 = arith.constant 0 : index
    %60 = vector.load %arg2[%c0_26, %59, %c0_27] : memref<3x32x128xf32, #tpu.memory_space<vmem>>, vector<1x32x128xf32>
    %61 = vector.shape_cast %60 : vector<1x32x128xf32> to vector<32x128xf32>
    %c1_28 = arith.constant 1 : index
    %62 = arith.index_cast %58 : i32 to index
    %c0_29 = arith.constant 0 : index
    %63 = vector.load %arg2[%c1_28, %62, %c0_29] : memref<3x32x128xf32, #tpu.memory_space<vmem>>, vector<1x32x128xf32>
    %64 = vector.shape_cast %63 : vector<1x32x128xf32> to vector<32x128xf32>
    %c2_30 = arith.constant 2 : index
    %65 = arith.index_cast %58 : i32 to index
    %c0_31 = arith.constant 0 : index
    %66 = vector.load %arg2[%c2_30, %65, %c0_31] : memref<3x32x128xf32, #tpu.memory_space<vmem>>, vector<1x32x128xf32>
    %67 = vector.shape_cast %66 : vector<1x32x128xf32> to vector<32x128xf32>
    %68 = vector.broadcast %4 : f32 to vector<32x128xf32>
    %69 = arith.subf %61, %68 : vector<32x128xf32>
    %70 = vector.broadcast %6 : f32 to vector<32x128xf32>
    %71 = arith.subf %64, %70 : vector<32x128xf32>
    %72 = vector.broadcast %8 : f32 to vector<32x128xf32>
    %73 = arith.subf %67, %72 : vector<32x128xf32>
    %74 = arith.mulf %69, %69 : vector<32x128xf32>
    %75 = arith.mulf %71, %71 : vector<32x128xf32>
    %76 = arith.addf %74, %75 : vector<32x128xf32>
    %77 = arith.mulf %73, %73 : vector<32x128xf32>
    %78 = arith.addf %76, %77 : vector<32x128xf32>
    %79 = vector.broadcast %10 : f32 to vector<32x128xf32>
    %80 = arith.subf %61, %79 : vector<32x128xf32>
    %81 = vector.broadcast %12 : f32 to vector<32x128xf32>
    %82 = arith.subf %64, %81 : vector<32x128xf32>
    %83 = vector.broadcast %14 : f32 to vector<32x128xf32>
    %84 = arith.subf %67, %83 : vector<32x128xf32>
    %85 = arith.mulf %80, %80 : vector<32x128xf32>
    %86 = arith.mulf %82, %82 : vector<32x128xf32>
    %87 = arith.addf %85, %86 : vector<32x128xf32>
    %88 = arith.mulf %84, %84 : vector<32x128xf32>
    %89 = arith.addf %87, %88 : vector<32x128xf32>
    %90 = arith.minimumf %78, %89 : vector<32x128xf32>
    %91 = vector.broadcast %16 : f32 to vector<32x128xf32>
    %92 = arith.subf %61, %91 : vector<32x128xf32>
    %93 = vector.broadcast %18 : f32 to vector<32x128xf32>
    %94 = arith.subf %64, %93 : vector<32x128xf32>
    %95 = vector.broadcast %20 : f32 to vector<32x128xf32>
    %96 = arith.subf %67, %95 : vector<32x128xf32>
    %97 = arith.mulf %92, %92 : vector<32x128xf32>
    %98 = arith.mulf %94, %94 : vector<32x128xf32>
    %99 = arith.addf %97, %98 : vector<32x128xf32>
    %100 = arith.mulf %96, %96 : vector<32x128xf32>
    %101 = arith.addf %99, %100 : vector<32x128xf32>
    %102 = arith.minimumf %90, %101 : vector<32x128xf32>
    %103 = vector.broadcast %22 : f32 to vector<32x128xf32>
    %104 = arith.subf %61, %103 : vector<32x128xf32>
    %105 = vector.broadcast %24 : f32 to vector<32x128xf32>
    %106 = arith.subf %64, %105 : vector<32x128xf32>
    %107 = vector.broadcast %26 : f32 to vector<32x128xf32>
    %108 = arith.subf %67, %107 : vector<32x128xf32>
    %109 = arith.mulf %104, %104 : vector<32x128xf32>
    %110 = arith.mulf %106, %106 : vector<32x128xf32>
    %111 = arith.addf %109, %110 : vector<32x128xf32>
    %112 = arith.mulf %108, %108 : vector<32x128xf32>
    %113 = arith.addf %111, %112 : vector<32x128xf32>
    %114 = arith.minimumf %102, %113 : vector<32x128xf32>
    %115 = vector.broadcast %28 : f32 to vector<32x128xf32>
    %116 = arith.subf %61, %115 : vector<32x128xf32>
    %117 = vector.broadcast %30 : f32 to vector<32x128xf32>
    %118 = arith.subf %64, %117 : vector<32x128xf32>
    %119 = vector.broadcast %32 : f32 to vector<32x128xf32>
    %120 = arith.subf %67, %119 : vector<32x128xf32>
    %121 = arith.mulf %116, %116 : vector<32x128xf32>
    %122 = arith.mulf %118, %118 : vector<32x128xf32>
    %123 = arith.addf %121, %122 : vector<32x128xf32>
    %124 = arith.mulf %120, %120 : vector<32x128xf32>
    %125 = arith.addf %123, %124 : vector<32x128xf32>
    %126 = arith.minimumf %114, %125 : vector<32x128xf32>
    %127 = vector.broadcast %34 : f32 to vector<32x128xf32>
    %128 = arith.subf %61, %127 : vector<32x128xf32>
    %129 = vector.broadcast %36 : f32 to vector<32x128xf32>
    %130 = arith.subf %64, %129 : vector<32x128xf32>
    %131 = vector.broadcast %38 : f32 to vector<32x128xf32>
    %132 = arith.subf %67, %131 : vector<32x128xf32>
    %133 = arith.mulf %128, %128 : vector<32x128xf32>
    %134 = arith.mulf %130, %130 : vector<32x128xf32>
    %135 = arith.addf %133, %134 : vector<32x128xf32>
    %136 = arith.mulf %132, %132 : vector<32x128xf32>
    %137 = arith.addf %135, %136 : vector<32x128xf32>
    %138 = arith.minimumf %126, %137 : vector<32x128xf32>
    %139 = vector.broadcast %40 : f32 to vector<32x128xf32>
    %140 = arith.subf %61, %139 : vector<32x128xf32>
    %141 = vector.broadcast %42 : f32 to vector<32x128xf32>
    %142 = arith.subf %64, %141 : vector<32x128xf32>
    %143 = vector.broadcast %44 : f32 to vector<32x128xf32>
    %144 = arith.subf %67, %143 : vector<32x128xf32>
    %145 = arith.mulf %140, %140 : vector<32x128xf32>
    %146 = arith.mulf %142, %142 : vector<32x128xf32>
    %147 = arith.addf %145, %146 : vector<32x128xf32>
    %148 = arith.mulf %144, %144 : vector<32x128xf32>
    %149 = arith.addf %147, %148 : vector<32x128xf32>
    %150 = arith.minimumf %138, %149 : vector<32x128xf32>
    %151 = vector.broadcast %46 : f32 to vector<32x128xf32>
    %152 = arith.subf %61, %151 : vector<32x128xf32>
    %153 = vector.broadcast %48 : f32 to vector<32x128xf32>
    %154 = arith.subf %64, %153 : vector<32x128xf32>
    %155 = vector.broadcast %50 : f32 to vector<32x128xf32>
    %156 = arith.subf %67, %155 : vector<32x128xf32>
    %157 = arith.mulf %152, %152 : vector<32x128xf32>
    %158 = arith.mulf %154, %154 : vector<32x128xf32>
    %159 = arith.addf %157, %158 : vector<32x128xf32>
    %160 = arith.mulf %156, %156 : vector<32x128xf32>
    %161 = arith.addf %159, %160 : vector<32x128xf32>
    %162 = arith.minimumf %150, %161 : vector<32x128xf32>
    %cst_32 = arith.constant 9.99999997E-7 : f32
    %163 = vector.broadcast %cst_32 : f32 to vector<32x128xf32>
    %164 = arith.addf %162, %163 : vector<32x128xf32>
    %165 = math.sqrt %164 : vector<32x128xf32>
    %c32_i32_33 = arith.constant 32 : i32
    %166 = arith.muli %arg0, %c32_i32_33 : i32
    %c32_i32_34 = arith.constant 32 : i32
    %167 = arith.muli %c0_i32_25, %c32_i32_34 : i32
    %168 = arith.addi %166, %167 : i32
    %c128_i32_35 = arith.constant 128 : i32
    %169 = arith.muli %168, %c128_i32_35 : i32
    %170 = vector.broadcast %169 : i32 to vector<32x128xi32>
    %171 = arith.addi %170, %55 : vector<32x128xi32>
    %c256_i32 = arith.constant 256 : i32
    %172 = vector.broadcast %c256_i32 : i32 to vector<32x128xi32>
    %173 = arith.cmpi slt, %171, %172 : vector<32x128xi32>
    %cst_36 = arith.constant 0.000000e+00 : f32
    %174 = vector.broadcast %cst_36 : f32 to vector<32x128xf32>
    %175 = arith.select %173, %165, %174 : vector<32x128xi1>, vector<32x128xf32>
    %176 = arith.addf %56, %175 : vector<32x128xf32>
    %c1_i32 = arith.constant 1 : i32
    %c0_37 = arith.constant 0 : index
    %c0_38 = arith.constant 0 : index
    %177 = vector.load %arg3[%c0_37, %c0_38] : memref<1x1xf32, #tpu.memory_space<vmem>>, vector<1x1xf32>
    %178 = vector.shape_cast %176 : vector<32x128xf32> to vector<1x32x128xf32>
    %cst_39 = arith.constant dense<0.000000e+00> : vector<1xf32>
    %179 = vector.multi_reduction <add>, %178, %cst_39 [1, 2] : vector<1x32x128xf32> to vector<1xf32>
    %180 = vector.shape_cast %179 : vector<1xf32> to vector<1x1x1xf32>
    %181 = vector.extract %180[0, 0, 0] : f32 from vector<1x1x1xf32>
    %cst_40 = arith.constant 0.00130208337 : f32
    %182 = arith.mulf %181, %cst_40 : f32
    %183 = vector.broadcast %182 : f32 to vector<1x1xf32>
    %184 = arith.addf %177, %183 : vector<1x1xf32>
    %c0_41 = arith.constant 0 : index
    %c0_42 = arith.constant 0 : index
    %185 = vector.load %arg3[%c0_41, %c0_42] : memref<1x1xf32, #tpu.memory_space<vmem>>, vector<1x1xf32>
    tpu.vector_store %arg3[%c0_41, %c0_42], %184 {strides = array<i32>} : memref<1x1xf32, #tpu.memory_space<vmem>>, vector<1x1xf32>,
    return
  }
  func.func @transform_0(%arg0: i32) -> i32 {
    %c0_i32 = arith.constant 0 : i32
    %c0_i32_0 = arith.constant 0 : i32
    return %c0_i32 : i32
  }
  func.func @transform_1(%arg0: i32) -> (i32, i32, i32) {
    %c0_i32 = arith.constant 0 : i32
    %c0_i32_0 = arith.constant 0 : i32
    %c0_i32_1 = arith.constant 0 : i32
    return %c0_i32, %arg0, %c0_i32_0 : i32, i32, i32
  }
  func.func @transform_2(%arg0: i32) -> (i32, i32) {
    %c0_i32 = arith.constant 0 : i32
    %c0_i32_0 = arith.constant 0 : i32
    %c0_i32_1 = arith.constant 0 : i32
    return %c0_i32, %c0_i32_0 : i32, i32
  }
}

</mosaic_0001>

<llo_original>
// kernel: tpu_custom_call.1
$region0: #{tpu_custom_call.1}
  #allocation0 [shape = 'u32[]', space=smem, size = 0x4, offset = 0x4, fixed_abs, tag = 'smem constant byte address 0x4 - core index']
  #allocation1 [shape = 'u32[72,128]{1,0:T(1,128)}', space=vmem, size = 0x9000, scoped, tag = 'internal scratch']
  %s0 = inlined_call_operand.hbm [shape: f32[24], index: 0, kind: input, shape index: {}]
  %s1 = inlined_call_operand.hbm [shape: f32[3,32,128], index: 1, kind: input, shape index: {}]
  %s2 = inlined_call_operand.hbm [shape: f32[1,1], index: 2, kind: output, shape index: {}]
  %s3 = sld [smem:[#allocation0]]
  $region30: #{tpu_custom_call.1} parent=0
    _
  %s5 = ssub.s32 1, %s3
  %s6 = scalar_select 0, %s5, %s3
  $region1: #{tpu_custom_call.1} parent=0
    #allocation2 [shape = 'u8[512]{0}', space=smem, size = 0x200, scoped, tag = 'input window, operand 0, single buffered']
    #allocation3 [shape = 's32[1]{0}', space=sflag, size = 0x4, scoped, tag = 'scoped memory for tpu_custom_call.1']
    #allocation4 [shape = 's32[1]{0}', space=sflag, size = 0x4, scoped, tag = 'scoped memory for tpu_custom_call.1']
    #allocation5 [shape = 's32[1]{0}', space=sflag, size = 0x4, scoped, tag = 'scoped memory for tpu_custom_call.1']
    #allocation6 [shape = 'u8[49152]{0}', space=vmem, size = 0xc000, scoped, tag = 'input window, operand 1, single buffered']
    #allocation7 [shape = 'u8[512]{0}', space=vmem, size = 0x400, scoped, tag = 'output window, operand 0, single buffered']
    %7 = vsyncpa [#allocation5], 0
    %8 = vsyncpa [#allocation3], 0
    %9 = vsyncpa [#allocation4], 0
    // Predicated region
    $region2: #{tpu_custom_call.1} parent=1 // pred_check
      _
    $region3: #{tpu_custom_call.1} parent=1 // pred_check_branch
      %11 = sbr.rel (0) target = $region5
    $region4: #{tpu_custom_call.1} parent=1 // pred_region
      %13 = vsyncadd [#allocation5], 0
      %s15 = sshll.u32 %s0, 4
      %s16 = int_to_ptr.hbm [resolvable:$true] %s15
      %18 = dma.hbm_to_smem %s16, 16, [#allocation2], [#allocation5]
    $region5: #{tpu_custom_call.1} parent=1 // pred_fallthru
      _
    // Predicated region
    $region6: #{tpu_custom_call.1} parent=1 // pred_check
      _
    $region7: #{tpu_custom_call.1} parent=1 // pred_check_branch
      %20 = sbr.rel (0) target = $region9
    $region8: #{tpu_custom_call.1} parent=1 // pred_region
      %22 = vsyncadd [#allocation3], 0
      %s23 = sshll.u32 %s1, 4
      %s24 = int_to_ptr.hbm [resolvable:$true] %s23
      %s25 = sshll.u32 [#allocation6], 4
      %s26 = int_to_ptr.vmem [resolvable:$true] %s25
      %31 = dma.hbm_to_vmem [thread:$0]  %s24, 1536, %s26, [#allocation3], 128, 128, 8
    $region9: #{tpu_custom_call.1} parent=1 // pred_fallthru
      _
    // Predicated region
    $region10: #{tpu_custom_call.1} parent=1 // pred_check
      _
    $region11: #{tpu_custom_call.1} parent=1 // pred_check_branch
      %33 = sbr.rel (0) target = $region13
    $region12: #{tpu_custom_call.1} parent=1 // pred_region
      %35 = dma.done [#allocation5], 16
    $region13: #{tpu_custom_call.1} parent=1 // pred_fallthru
      _
    // Predicated region
    $region14: #{tpu_custom_call.1} parent=1 // pred_check
      _
    $region15: #{tpu_custom_call.1} parent=1 // pred_check_branch
      %37 = sbr.rel (0) target = $region17
    $region16: #{tpu_custom_call.1} parent=1 // pred_region
      %39 = dma.done [#allocation3], 1536
    $region17: #{tpu_custom_call.1} parent=1 // pred_fallthru
      _
    %40 = sfence
    %p41 = scmp.eq.s32.totalorder 0, 0
    // Predicated region
    $region18: #{tpu_custom_call.1} parent=1 // pred_check
      %p42 = pneg %p41
    $region19: #{tpu_custom_call.1} parent=1 // pred_check_branch
      %44 = sbr.rel (%p42) target = $region21
    $region20: #{tpu_custom_call.1} parent=1 // pred_region
      %vm45 = vcmask 0
      %46 = vst.msk [vmem:[#allocation7] sm:$0x1] %vm45, 0.0
    $region21: #{tpu_custom_call.1} parent=1 // pred_fallthru
      _
    %s47 = sld [smem:[#allocation2]]
    %s48 = ssub.f32 %s47, 1e-06
    %s49 = sld [smem:[#allocation2 + $0x1]]
    %s50 = ssub.f32 %s49, 1e-06
    %s51 = sld [smem:[#allocation2 + $0x2]]
    %s52 = ssub.f32 %s51, 1e-06
    %s53 = sld [smem:[#allocation2 + $0x3]]
    %s54 = ssub.f32 %s53, 1e-06
    %s55 = sld [smem:[#allocation2 + $0x4]]
    %s56 = ssub.f32 %s55, 1e-06
    %s57 = sld [smem:[#allocation2 + $0x5]]
    %s58 = ssub.f32 %s57, 1e-06
    %s59 = sld [smem:[#allocation2 + $0x6]]
    %s60 = ssub.f32 %s59, 1e-06
    %s61 = sld [smem:[#allocation2 + $0x7]]
    %s62 = ssub.f32 %s61, 1e-06
    %s63 = sld [smem:[#allocation2 + $0x8]]
    %s64 = ssub.f32 %s63, 1e-06
    %s65 = sld [smem:[#allocation2 + $0x9]]
    %s66 = ssub.f32 %s65, 1e-06
    %s67 = sld [smem:[#allocation2 + $0xa]]
    %s68 = ssub.f32 %s67, 1e-06
    %s69 = sld [smem:[#allocation2 + $0xb]]
    %s70 = ssub.f32 %s69, 1e-06
    %s71 = sld [smem:[#allocation2 + $0xc]]
    %s72 = ssub.f32 %s71, 1e-06
    %s73 = sld [smem:[#allocation2 + $0xd]]
    %s74 = ssub.f32 %s73, 1e-06
    %s75 = sld [smem:[#allocation2 + $0xe]]
    %s76 = ssub.f32 %s75, 1e-06
    %s77 = sld [smem:[#allocation2 + $0xf]]
    %s78 = ssub.f32 %s77, 1e-06
    %s79 = sld [smem:[#allocation2 + $0x10]]
    %s80 = ssub.f32 %s79, 1e-06
    %s81 = sld [smem:[#allocation2 + $0x11]]
    %s82 = ssub.f32 %s81, 1e-06
    %s83 = sld [smem:[#allocation2 + $0x12]]
    %s84 = ssub.f32 %s83, 1e-06
    %s85 = sld [smem:[#allocation2 + $0x13]]
    %s86 = ssub.f32 %s85, 1e-06
    %s87 = sld [smem:[#allocation2 + $0x14]]
    %s88 = ssub.f32 %s87, 1e-06
    %s89 = sld [smem:[#allocation2 + $0x15]]
    %s90 = ssub.f32 %s89, 1e-06
    %s91 = sld [smem:[#allocation2 + $0x16]]
    %s92 = ssub.f32 %s91, 1e-06
    %s93 = sld [smem:[#allocation2 + $0x17]]
    %s94 = ssub.f32 %s93, 1e-06
    %v95 = vlaneseq
    %v96 = vshrl.u32 %v95, 7
    %v97 = vadd.s32 %v96, 8
    %v98 = vadd.s32 %v96, 16
    %v99 = vadd.s32 %v96, 24
    %v100 = vlaneseq
    %v101 = vand.u32 %v100, 127
    %v102 = vmul.u32 %v96, 128
    %v103 = vmul.u32 %v97, 128
    %v104 = vmul.u32 %v98, 128
    %v105 = vmul.u32 %v99, 128
    %v106 = vadd.s32 %v102, %v101
    %v107 = vadd.s32 %v103, %v101
    %v108 = vadd.s32 %v104, %v101
    %v109 = vadd.s32 %v105, %v101
    %v110 = vld [vmem:[#allocation6] sm:$0xff]
    %v111 = vld [vmem:[#allocation6 + $0x8] sm:$0xff]
    %v112 = vld [vmem:[#allocation6 + $0x10] sm:$0xff]
    %v113 = vld [vmem:[#allocation6 + $0x18] sm:$0xff]
    %s114 = sadd.s32 0, 32
    %s115 = scalar_lea.vmem [#allocation6], %s114
    %v116 = vld [vmem:[%s115] sm:$0xff]
    %v117 = vld [vmem:[%s115 + $0x8] sm:$0xff]
    %v118 = vld [vmem:[%s115 + $0x10] sm:$0xff]
    %v119 = vld [vmem:[%s115 + $0x18] sm:$0xff]
    %s120 = sadd.s32 0, 64
    %s121 = scalar_lea.vmem [#allocation6], %s120
    %v122 = vld [vmem:[%s121] sm:$0xff]
    %v123 = vld [vmem:[%s121 + $0x8] sm:$0xff]
    %v124 = vld [vmem:[%s121 + $0x10] sm:$0xff]
    %v125 = vld [vmem:[%s121 + $0x18] sm:$0xff]
    %v126 = vstv %s48
    %v127 = vsub.f32 %v110, %v126
    %v128 = vsub.f32 %v111, %v126
    %v129 = vsub.f32 %v112, %v126
    %v130 = vsub.f32 %v113, %v126
    %v131 = vstv %s50
    %v132 = vsub.f32 %v116, %v131
    %v133 = vsub.f32 %v117, %v131
    %v134 = vsub.f32 %v118, %v131
    %v135 = vsub.f32 %v119, %v131
    %v136 = vstv %s52
    %v137 = vsub.f32 %v122, %v136
    %v138 = vsub.f32 %v123, %v136
    %v139 = vsub.f32 %v124, %v136
    %v140 = vsub.f32 %v125, %v136
    %v141 = vmul.f32 %v127, %v127
    %v142 = vmul.f32 %v128, %v128
    %v143 = vmul.f32 %v129, %v129
    %v144 = vmul.f32 %v130, %v130
    %v145 = vmul.f32 %v132, %v132
    %v146 = vmul.f32 %v133, %v133
    %v147 = vmul.f32 %v134, %v134
    %v148 = vmul.f32 %v135, %v135
    %v149 = vadd.f32 %v141, %v145
    %v150 = vadd.f32 %v142, %v146
    %v151 = vadd.f32 %v143, %v147
    %v152 = vadd.f32 %v144, %v148
    %v153 = vmul.f32 %v137, %v137
    %v154 = vmul.f32 %v138, %v138
    %v155 = vmul.f32 %v139, %v139
    %v156 = vmul.f32 %v140, %v140
    %v157 = vadd.f32 %v149, %v153
    %v158 = vadd.f32 %v150, %v154
    %v159 = vadd.f32 %v151, %v155
    %v160 = vadd.f32 %v152, %v156
    %v161 = vstv %s54
    %v162 = vsub.f32 %v110, %v161
    %v163 = vsub.f32 %v111, %v161
    %v164 = vsub.f32 %v112, %v161
    %v165 = vsub.f32 %v113, %v161
    %v166 = vstv %s56
    %v167 = vsub.f32 %v116, %v166
    %v168 = vsub.f32 %v117, %v166
    %v169 = vsub.f32 %v118, %v166
    %v170 = vsub.f32 %v119, %v166
    %v171 = vstv %s58
    %v172 = vsub.f32 %v122, %v171
    %v173 = vsub.f32 %v123, %v171
    %v174 = vsub.f32 %v124, %v171
    %v175 = vsub.f32 %v125, %v171
    %v176 = vmul.f32 %v162, %v162
    %v177 = vmul.f32 %v163, %v163
    %v178 = vmul.f32 %v164, %v164
    %v179 = vmul.f32 %v165, %v165
    %v180 = vmul.f32 %v167, %v167
    %v181 = vmul.f32 %v168, %v168
    %v182 = vmul.f32 %v169, %v169
    %v183 = vmul.f32 %v170, %v170
    %v184 = vadd.f32 %v176, %v180
    %v185 = vadd.f32 %v177, %v181
    %v186 = vadd.f32 %v178, %v182
    %v187 = vadd.f32 %v179, %v183
    %v188 = vmul.f32 %v172, %v172
    %v189 = vmul.f32 %v173, %v173
    %v190 = vmul.f32 %v174, %v174
    %v191 = vmul.f32 %v175, %v175
    %v192 = vadd.f32 %v184, %v188
    %v193 = vadd.f32 %v185, %v189
    %v194 = vadd.f32 %v186, %v190
    %v195 = vadd.f32 %v187, %v191
    %v196 = vmin.f32 %v157, %v192
    %v197 = vmin.f32 %v158, %v193
    %v198 = vmin.f32 %v159, %v194
    %v199 = vmin.f32 %v160, %v195
    %v200 = vstv %s60
    %v201 = vsub.f32 %v110, %v200
    %v202 = vsub.f32 %v111, %v200
    %v203 = vsub.f32 %v112, %v200
    %v204 = vsub.f32 %v113, %v200
    %v205 = vstv %s62
    %v206 = vsub.f32 %v116, %v205
    %v207 = vsub.f32 %v117, %v205
    %v208 = vsub.f32 %v118, %v205
    %v209 = vsub.f32 %v119, %v205
    %v210 = vstv %s64
    %v211 = vsub.f32 %v122, %v210
    %v212 = vsub.f32 %v123, %v210
    %v213 = vsub.f32 %v124, %v210
    %v214 = vsub.f32 %v125, %v210
    %v215 = vmul.f32 %v201, %v201
    %v216 = vmul.f32 %v202, %v202
    %v217 = vmul.f32 %v203, %v203
    %v218 = vmul.f32 %v204, %v204
    %v219 = vmul.f32 %v206, %v206
    %v220 = vmul.f32 %v207, %v207
    %v221 = vmul.f32 %v208, %v208
    %v222 = vmul.f32 %v209, %v209
    %v223 = vadd.f32 %v215, %v219
    %v224 = vadd.f32 %v216, %v220
    %v225 = vadd.f32 %v217, %v221
    %v226 = vadd.f32 %v218, %v222
    %v227 = vmul.f32 %v211, %v211
    %v228 = vmul.f32 %v212, %v212
    %v229 = vmul.f32 %v213, %v213
    %v230 = vmul.f32 %v214, %v214
    %v231 = vadd.f32 %v223, %v227
    %v232 = vadd.f32 %v224, %v228
    %v233 = vadd.f32 %v225, %v229
    %v234 = vadd.f32 %v226, %v230
    %v235 = vmin.f32 %v196, %v231
    %v236 = vmin.f32 %v197, %v232
    %v237 = vmin.f32 %v198, %v233
    %v238 = vmin.f32 %v199, %v234
    %v239 = vstv %s66
    %v240 = vsub.f32 %v110, %v239
    %v241 = vsub.f32 %v111, %v239
    %v242 = vsub.f32 %v112, %v239
    %v243 = vsub.f32 %v113, %v239
    %v244 = vstv %s68
    %v245 = vsub.f32 %v116, %v244
    %v246 = vsub.f32 %v117, %v244
    %v247 = vsub.f32 %v118, %v244
    %v248 = vsub.f32 %v119, %v244
    %v249 = vstv %s70
    %v250 = vsub.f32 %v122, %v249
    %v251 = vsub.f32 %v123, %v249
    %v252 = vsub.f32 %v124, %v249
    %v253 = vsub.f32 %v125, %v249
    %v254 = vmul.f32 %v240, %v240
    %v255 = vmul.f32 %v241, %v241
    %v256 = vmul.f32 %v242, %v242
    %v257 = vmul.f32 %v243, %v243
    %v258 = vmul.f32 %v245, %v245
    %v259 = vmul.f32 %v246, %v246
    %v260 = vmul.f32 %v247, %v247
    %v261 = vmul.f32 %v248, %v248
    %v262 = vadd.f32 %v254, %v258
    %v263 = vadd.f32 %v255, %v259
    %v264 = vadd.f32 %v256, %v260
    %v265 = vadd.f32 %v257, %v261
    %v266 = vmul.f32 %v250, %v250
    %v267 = vmul.f32 %v251, %v251
    %v268 = vmul.f32 %v252, %v252
    %v269 = vmul.f32 %v253, %v253
    %v270 = vadd.f32 %v262, %v266
    %v271 = vadd.f32 %v263, %v267
    %v272 = vadd.f32 %v264, %v268
    %v273 = vadd.f32 %v265, %v269
    %v274 = vmin.f32 %v235, %v270
    %v275 = vmin.f32 %v236, %v271
    %v276 = vmin.f32 %v237, %v272
    %v277 = vmin.f32 %v238, %v273
    %v278 = vstv %s72
    %v279 = vsub.f32 %v110, %v278
    %v280 = vsub.f32 %v111, %v278
    %v281 = vsub.f32 %v112, %v278
    %v282 = vsub.f32 %v113, %v278
    %v283 = vstv %s74
    %v284 = vsub.f32 %v116, %v283
    %v285 = vsub.f32 %v117, %v283
    %v286 = vsub.f32 %v118, %v283
    %v287 = vsub.f32 %v119, %v283
    %v288 = vstv %s76
    %v289 = vsub.f32 %v122, %v288
    %v290 = vsub.f32 %v123, %v288
    %v291 = vsub.f32 %v124, %v288
    %v292 = vsub.f32 %v125, %v288
    %v293 = vmul.f32 %v279, %v279
    %v294 = vmul.f32 %v280, %v280
    %v295 = vmul.f32 %v281, %v281
    %v296 = vmul.f32 %v282, %v282
    %v297 = vmul.f32 %v284, %v284
    %v298 = vmul.f32 %v285, %v285
    %v299 = vmul.f32 %v286, %v286
    %v300 = vmul.f32 %v287, %v287
    %v301 = vadd.f32 %v293, %v297
    %v302 = vadd.f32 %v294, %v298
    %v303 = vadd.f32 %v295, %v299
    %v304 = vadd.f32 %v296, %v300
    %v305 = vmul.f32 %v289, %v289
    %v306 = vmul.f32 %v290, %v290
    %v307 = vmul.f32 %v291, %v291
    %v308 = vmul.f32 %v292, %v292
    %v309 = vadd.f32 %v301, %v305
    %v310 = vadd.f32 %v302, %v306
    %v311 = vadd.f32 %v303, %v307
    %v312 = vadd.f32 %v304, %v308
    %v313 = vmin.f32 %v274, %v309
    %v314 = vmin.f32 %v275, %v310
    %v315 = vmin.f32 %v276, %v311
    %v316 = vmin.f32 %v277, %v312
    %v317 = vstv %s78
    %v318 = vsub.f32 %v110, %v317
    %v319 = vsub.f32 %v111, %v317
    %v320 = vsub.f32 %v112, %v317
    %v321 = vsub.f32 %v113, %v317
    %v322 = vstv %s80
    %v323 = vsub.f32 %v116, %v322
    %v324 = vsub.f32 %v117, %v322
    %v325 = vsub.f32 %v118, %v322
    %v326 = vsub.f32 %v119, %v322
    %v327 = vstv %s82
    %v328 = vsub.f32 %v122, %v327
    %v329 = vsub.f32 %v123, %v327
    %v330 = vsub.f32 %v124, %v327
    %v331 = vsub.f32 %v125, %v327
    %v332 = vmul.f32 %v318, %v318
    %v333 = vmul.f32 %v319, %v319
    %v334 = vmul.f32 %v320, %v320
    %v335 = vmul.f32 %v321, %v321
    %v336 = vmul.f32 %v323, %v323
    %v337 = vmul.f32 %v324, %v324
    %v338 = vmul.f32 %v325, %v325
    %v339 = vmul.f32 %v326, %v326
    %v340 = vadd.f32 %v332, %v336
    %v341 = vadd.f32 %v333, %v337
    %v342 = vadd.f32 %v334, %v338
    %v343 = vadd.f32 %v335, %v339
    %v344 = vmul.f32 %v328, %v328
    %v345 = vmul.f32 %v329, %v329
    %v346 = vmul.f32 %v330, %v330
    %v347 = vmul.f32 %v331, %v331
    %v348 = vadd.f32 %v340, %v344
    %v349 = vadd.f32 %v341, %v345
    %v350 = vadd.f32 %v342, %v346
    %v351 = vadd.f32 %v343, %v347
    %v352 = vmin.f32 %v313, %v348
    %v353 = vmin.f32 %v314, %v349
    %v354 = vmin.f32 %v315, %v350
    %v355 = vmin.f32 %v316, %v351
    %v356 = vstv %s84
    %v357 = vsub.f32 %v110, %v356
    %v358 = vsub.f32 %v111, %v356
    %v359 = vsub.f32 %v112, %v356
    %v360 = vsub.f32 %v113, %v356
    %v361 = vstv %s86
    %v362 = vsub.f32 %v116, %v361
    %v363 = vsub.f32 %v117, %v361
    %v364 = vsub.f32 %v118, %v361
    %v365 = vsub.f32 %v119, %v361
    %v366 = vstv %s88
    %v367 = vsub.f32 %v122, %v366
    %v368 = vsub.f32 %v123, %v366
    %v369 = vsub.f32 %v124, %v366
    %v370 = vsub.f32 %v125, %v366
    %v371 = vmul.f32 %v357, %v357
    %v372 = vmul.f32 %v358, %v358
    %v373 = vmul.f32 %v359, %v359
    %v374 = vmul.f32 %v360, %v360
    %v375 = vmul.f32 %v362, %v362
    %v376 = vmul.f32 %v363, %v363
    %v377 = vmul.f32 %v364, %v364
    %v378 = vmul.f32 %v365, %v365
    %v379 = vadd.f32 %v371, %v375
    %v380 = vadd.f32 %v372, %v376
    %v381 = vadd.f32 %v373, %v377
    %v382 = vadd.f32 %v374, %v378
    %v383 = vmul.f32 %v367, %v367
    %v384 = vmul.f32 %v368, %v368
    %v385 = vmul.f32 %v369, %v369
    %v386 = vmul.f32 %v370, %v370
    %v387 = vadd.f32 %v379, %v383
    %v388 = vadd.f32 %v380, %v384
    %v389 = vadd.f32 %v381, %v385
    %v390 = vadd.f32 %v382, %v386
    %v391 = vmin.f32 %v352, %v387
    %v392 = vmin.f32 %v353, %v388
    %v393 = vmin.f32 %v354, %v389
    %v394 = vmin.f32 %v355, %v390
    %v395 = vstv %s90
    %v396 = vsub.f32 %v110, %v395
    %v397 = vsub.f32 %v111, %v395
    %v398 = vsub.f32 %v112, %v395
    %v399 = vsub.f32 %v113, %v395
    %v400 = vstv %s92
    %v401 = vsub.f32 %v116, %v400
    %v402 = vsub.f32 %v117, %v400
    %v403 = vsub.f32 %v118, %v400
    %v404 = vsub.f32 %v119, %v400
    %v405 = vstv %s94
    %v406 = vsub.f32 %v122, %v405
    %v407 = vsub.f32 %v123, %v405
    %v408 = vsub.f32 %v124, %v405
    %v409 = vsub.f32 %v125, %v405
    %v410 = vmul.f32 %v396, %v396
    %v411 = vmul.f32 %v397, %v397
    %v412 = vmul.f32 %v398, %v398
    %v413 = vmul.f32 %v399, %v399
    %v414 = vmul.f32 %v401, %v401
    %v415 = vmul.f32 %v402, %v402
    %v416 = vmul.f32 %v403, %v403
    %v417 = vmul.f32 %v404, %v404
    %v418 = vadd.f32 %v410, %v414
    %v419 = vadd.f32 %v411, %v415
    %v420 = vadd.f32 %v412, %v416
    %v421 = vadd.f32 %v413, %v417
    %v422 = vmul.f32 %v406, %v406
    %v423 = vmul.f32 %v407, %v407
    %v424 = vmul.f32 %v408, %v408
    %v425 = vmul.f32 %v409, %v409
    %v426 = vadd.f32 %v418, %v422
    %v427 = vadd.f32 %v419, %v423
    %v428 = vadd.f32 %v420, %v424
    %v429 = vadd.f32 %v421, %v425
    %v430 = vmin.f32 %v391, %v426
    %v431 = vmin.f32 %v392, %v427
    %v432 = vmin.f32 %v393, %v428
    %v433 = vmin.f32 %v394, %v429
    %v434 = vadd.f32 %v430, 1e-06
    %v435 = vadd.f32 %v431, 1e-06
    %v436 = vadd.f32 %v432, 1e-06
    %v437 = vadd.f32 %v433, 1e-06
    %v438 = vrsqrt.pop %v434
    %v439 = vmul.f32 %v438, %v434
    %v440 = vmul.f32 %v439, %v438
    %v441 = vmul.f32 0.5, %v440
    %v442 = vsub.f32 1.5, %v441
    %v443 = vmul.f32 %v438, %v442
    %v444 = vmul.f32 %v434, %v443
    %vm445 = vcmp.eq.f32.partialorder %v434, inf
    %v446 = vsel %vm445, %v434, %v444
    %vm447 = vcmp.eq.f32.partialorder %v434, 0.0
    %v448 = vand.u32 %v434, 2147483648
    %v449 = vsel %vm447, %v448, %v446
    %v450 = vrsqrt.pop %v435
    %v451 = vmul.f32 %v450, %v435
    %v452 = vmul.f32 %v451, %v450
    %v453 = vmul.f32 0.5, %v452
    %v454 = vsub.f32 1.5, %v453
    %v455 = vmul.f32 %v450, %v454
    %v456 = vmul.f32 %v435, %v455
    %vm457 = vcmp.eq.f32.partialorder %v435, inf
    %v458 = vsel %vm457, %v435, %v456
    %vm459 = vcmp.eq.f32.partialorder %v435, 0.0
    %v460 = vand.u32 %v435, 2147483648
    %v461 = vsel %vm459, %v460, %v458
    %v462 = vrsqrt.pop %v436
    %v463 = vmul.f32 %v462, %v436
    %v464 = vmul.f32 %v463, %v462
    %v465 = vmul.f32 0.5, %v464
    %v466 = vsub.f32 1.5, %v465
    %v467 = vmul.f32 %v462, %v466
    %v468 = vmul.f32 %v436, %v467
    %vm469 = vcmp.eq.f32.partialorder %v436, inf
    %v470 = vsel %vm469, %v436, %v468
    %vm471 = vcmp.eq.f32.partialorder %v436, 0.0
    %v472 = vand.u32 %v436, 2147483648
    %v473 = vsel %vm471, %v472, %v470
    %v474 = vrsqrt.pop %v437
    %v475 = vmul.f32 %v474, %v437
    %v476 = vmul.f32 %v475, %v474
    %v477 = vmul.f32 0.5, %v476
    %v478 = vsub.f32 1.5, %v477
    %v479 = vmul.f32 %v474, %v478
    %v480 = vmul.f32 %v437, %v479
    %vm481 = vcmp.eq.f32.partialorder %v437, inf
    %v482 = vsel %vm481, %v437, %v480
    %vm483 = vcmp.eq.f32.partialorder %v437, 0.0
    %v484 = vand.u32 %v437, 2147483648
    %v485 = vsel %vm483, %v484, %v482
    %s486 = smul.u32 0, 4096
    %v487 = vstv %s486
    %v488 = vadd.s32 %v487, %v106
    %v489 = vadd.s32 %v487, %v107
    %v490 = vadd.s32 %v487, %v108
    %v491 = vadd.s32 %v487, %v109
    %vm492 = vcmp.lt.s32.totalorder %v488, 256
    %vm493 = vcmp.lt.s32.totalorder %v489, 256
    %vm494 = vcmp.lt.s32.totalorder %v490, 256
    %vm495 = vcmp.lt.s32.totalorder %v491, 256
    %v496 = vsel %vm492, %v449, 0.0
    %v497 = vsel %vm493, %v461, 0.0
    %v498 = vsel %vm494, %v473, 0.0
    %v499 = vsel %vm495, %v485, 0.0
    %v500 = vadd.f32 %v496, 0.0
    %v501 = vadd.f32 %v497, 0.0
    %v502 = vadd.f32 %v498, 0.0
    %v503 = vadd.f32 %v499, 0.0
    %v504 = vld [vmem:[#allocation7] sm:$0x1]
    %v505 = vadd.f32 %v500, %v501
    %v506 = vadd.f32 %v505, %v502
    %v507 = vadd.f32 %v506, %v503
    %508 = vadd.xlane.f32.xlu0 %v507
    %v509 = vpop.xlane.xlu0 %508
    %v510 = vrot.slane %v509, 4
    %v511 = vadd.f32 %v509, %v510
    %v512 = vrot.slane %v511, 2
    %v513 = vadd.f32 %v511, %v512
    %v514 = vrot.slane %v513, 1
    %v515 = vadd.f32 %v513, %v514
    %s516 = vtos %v515
    %s517 = smul.f32 %s516, 0.0013020834
    %v518 = vstv %s517
    %v519 = vadd.f32 %v504, %v518
    %vm520 = vcmask 0
    %521 = vst.msk [vmem:[#allocation7] sm:$0x1] %vm520, %v519
    // Predicated region
    $region22: #{tpu_custom_call.1} parent=1 // pred_check
      _
    $region23: #{tpu_custom_call.1} parent=1 // pred_check_branch
      %523 = sbr.rel (0) target = $region25
    $region24: #{tpu_custom_call.1} parent=1 // pred_region
      %525 = vsyncadd [#allocation4], 0
      %s527 = sshll.u32 [#allocation7], 4
      %s528 = int_to_ptr.vmem [resolvable:$true] %s527
      %s529 = sshll.u32 %s2, 4
      %s530 = int_to_ptr.hbm [resolvable:$true] %s529
      %532 = dma.vmem_to_hbm [thread:$0]  %s528, 16, %s530, [#allocation4]
    $region25: #{tpu_custom_call.1} parent=1 // pred_fallthru
      _
    // Predicated region
    $region26: #{tpu_custom_call.1} parent=1 // pred_check
      _
    $region27: #{tpu_custom_call.1} parent=1 // pred_check_branch
      %534 = sbr.rel (0) target = $region29
    $region28: #{tpu_custom_call.1} parent=1 // pred_region
      %536 = dma.done [#allocation4], 16
    $region29: #{tpu_custom_call.1} parent=1 // pred_fallthru
      _
    %537 = vsyncpa [#allocation3], 1
    %538 = vsyncpa [#allocation4], 1
    %539 = vsyncpa [#allocation5], 1

</llo_original>
